<compile_context>
chip_gen: v7x
topology: tpu7x:2x2x1
jax: 0.10.0
libtpu: 0.0.40
codegen_flags: <defaults>
</compile_context>

<pallas_src>
import jax
import jax.numpy as jnp
from jax.experimental import pallas as pl
from jax.experimental.pallas import tpu as pltpu


def _scale_mul_kernel(scale_ref, x_ref, o_ref):
    # scale_ref: (block_c, 1); x_ref/o_ref: (block_c, HW).
    # Per-channel scale, lane-broadcast across the flattened spatial axis;
    # written in place over x's block (input_output_aliases).
    o_ref[...] = scale_ref[...] * x_ref[...]


def _num_channel_blocks(c):
    """1 grid step on single-TC chips (v5e/v6e); 2 equal blocks on v7x."""
    try:
        kind = jax.devices()[0].device_kind.lower()
    except Exception:
        kind = ""
    if "v7" in kind and c % 2 == 0 and (c // 2) % 8 == 0:
        return 2  # one 192-channel block per TensorCore
    return 1


def layer_scale_mul(layer_scale, x):
    """layer_scale: (C, 1, 1) f32, x: (1, C, H, W) f32 -> (1, C, H, W) f32."""
    n, c, h, w = x.shape
    assert n == 1, "module fixes batch=1"
    hw = h * w

    x2d = x.reshape(c, hw)               # (C, HW) -- contiguous view, no copy
    scale2d = layer_scale.reshape(c, 1)  # (C, 1)

    num_blocks = _num_channel_blocks(c)
    block_c = c // num_blocks

    # ~75K VPU multiplies, ~0.6 MB HBM traffic (read x + scale, write out).
    cost = pl.CostEstimate(
        flops=c * hw,
        transcendentals=0,
        bytes_accessed=2 * c * hw * x.dtype.itemsize + c * x.dtype.itemsize,
    )

    out2d = pl.pallas_call(
        _scale_mul_kernel,
        out_shape=jax.ShapeDtypeStruct((c, hw), x.dtype),
        grid=(num_blocks,),
        in_specs=[
            pl.BlockSpec((block_c, 1), lambda i: (i, 0)),    # per-block scale
            pl.BlockSpec((block_c, hw), lambda i: (i, 0)),   # x block
        ],
        out_specs=pl.BlockSpec((block_c, hw), lambda i: (i, 0)),
        # Elementwise, same block index in and out: every block is fully
        # DMA'd into VMEM before its writeback -> safe to alias x2d with the
        # single output.
        input_output_aliases={1: 0},
        cost_estimate=cost,
        compiler_params=pltpu.CompilerParams(
            dimension_semantics=("parallel",),
        ),
    )(scale2d, x2d)

    return out2d.reshape(n, c, h, w)


# Donate x so the in-place alias actually reuses its HBM buffer end-to-end.
_layer_scale_mul_jit = jax.jit(layer_scale_mul, donate_argnums=(1,))


if __name__ == "__main__":
    key = jax.random.PRNGKey(0)
    k_scale, k_x = jax.random.split(key)

    # Matches torch.rand([384, 1, 1]) (U[0,1)) and the module's input shape.
    layer_scale = jax.random.uniform(k_scale, (384, 1, 1), dtype=jnp.float32)
    x367 = jax.random.normal(k_x, (1, 384, 14, 14), dtype=jnp.float32)

    # Compute the reference BEFORE the kernel call: x367 is donated and the
    # kernel writes its result in place.
    ref = layer_scale * x367  # (384,1,1) * (1,384,14,14) -> (1,384,14,14)
    ref = jax.block_until_ready(ref)

    out = _layer_scale_mul_jit(layer_scale, x367)
    out = jax.block_until_ready(out)

    assert out.shape == (1, 384, 14, 14)
    assert jnp.allclose(out, ref, atol=1e-6, rtol=1e-6)
    print("KERNEL_OK")
</pallas_src>

<mosaic_0001>
module attributes {stable_mosaic.version = 11 : i64} {
  func.func @_scale_mul_kernel(%arg0: i32, %arg1: memref<384x1xf32, #tpu.memory_space<vmem>>, %arg2: memref<384x196xf32, #tpu.memory_space<vmem>>, %arg3: memref<384x196xf32, #tpu.memory_space<vmem>>) attributes {dimension_semantics = [#tpu.dimension_semantics<parallel>], iteration_bounds = array<i64: 1>, scalar_prefetch = 0 : i64, scratch_operands = 0 : i64, tpu.core_type = #tpu.core_type<tc>, window_params = [{transform_indices = @transform_0, window_bounds = array<i64: 384, 1>}, {transform_indices = @transform_1, window_bounds = array<i64: 384, 196>}, {transform_indices = @transform_2, window_bounds = array<i64: 384, 196>}]} {
    %c0 = arith.constant 0 : index
    %c0_0 = arith.constant 0 : index
    %0 = vector.load %arg1[%c0, %c0_0] : memref<384x1xf32, #tpu.memory_space<vmem>>, vector<384x1xf32>
    %c0_1 = arith.constant 0 : index
    %c0_2 = arith.constant 0 : index
    %1 = vector.load %arg2[%c0_1, %c0_2] : memref<384x196xf32, #tpu.memory_space<vmem>>, vector<384x196xf32>
    %2 = vector.broadcast %0 : vector<384x1xf32> to vector<384x196xf32>
    %3 = arith.mulf %2, %1 : vector<384x196xf32>
    %c0_3 = arith.constant 0 : index
    %c0_4 = arith.constant 0 : index
    %4 = vector.load %arg3[%c0_3, %c0_4] : memref<384x196xf32, #tpu.memory_space<vmem>>, vector<384x196xf32>
    tpu.vector_store %arg3[%c0_3, %c0_4], %3 {strides = array<i32>} : memref<384x196xf32, #tpu.memory_space<vmem>>, vector<384x196xf32>,
    return
  }
  func.func @transform_0(%arg0: i32) -> (i32, i32) {
    %c0_i32 = arith.constant 0 : i32
    %c0_i32_0 = arith.constant 0 : i32
    return %arg0, %c0_i32 : i32, i32
  }
  func.func @transform_1(%arg0: i32) -> (i32, i32) {
    %c0_i32 = arith.constant 0 : i32
    %c0_i32_0 = arith.constant 0 : i32
    return %arg0, %c0_i32 : i32, i32
  }
  func.func @transform_2(%arg0: i32) -> (i32, i32) {
    %c0_i32 = arith.constant 0 : i32
    %c0_i32_0 = arith.constant 0 : i32
    return %arg0, %c0_i32 : i32, i32
  }
}

</mosaic_0001>

<llo_original>
// kernel: layer_scale_mul.1
$region0: #{layer_scale_mul.1}
  #allocation0 [shape = 'u32[]', space=smem, size = 0x4, offset = 0x4, fixed_abs, tag = 'smem constant byte address 0x4 - core index']
  #allocation1 [shape = 'u32[144,128]{1,0:T(1,128)}', space=vmem, size = 0x12000, scoped, tag = 'internal scratch']
  %s0 = inlined_call_operand.vmem [shape: f32[384,1], index: 0, kind: input, shape index: {}]
  %s1 = inlined_call_operand.vmem [shape: f32[384,196], index: 1, kind: input, shape index: {}, may-alias: {1,2}]
  %s2 = inlined_call_operand.vmem [shape: f32[384,196], index: 2, kind: output, shape index: {}, may-alias: {1,2}]
  %s3 = sld [smem:[#allocation0]]
  $region18: #{layer_scale_mul.1} parent=0
    _
  %s5 = ssub.s32 1, %s3
  %s6 = scalar_select 0, %s5, %s3
  // Predicated region
  $region2: #{layer_scale_mul.1} parent=0 // pred_check
    _
  $region3: #{layer_scale_mul.1} parent=0 // pred_check_branch
    %8 = sbr.rel (0) target = $region5
  $region4: #{layer_scale_mul.1} parent=0 // pred_region
    _
  $region5: #{layer_scale_mul.1} parent=0 // pred_fallthru
    _
  // Predicated region
  $region6: #{layer_scale_mul.1} parent=0 // pred_check
    _
  $region7: #{layer_scale_mul.1} parent=0 // pred_check_branch
    %10 = sbr.rel (0) target = $region9
  $region8: #{layer_scale_mul.1} parent=0 // pred_region
    _
  $region9: #{layer_scale_mul.1} parent=0 // pred_fallthru
    _
  %v11 = vld [vmem:[%s0] sm:$0xff]
  %v12 = vld [vmem:[%s0 + $0x8] sm:$0xff]
  %v13 = vld [vmem:[%s0 + $0x10] sm:$0xff]
  %v14 = vld [vmem:[%s0 + $0x18] sm:$0xff]
  %v15 = vld [vmem:[%s0 + $0x20] sm:$0xff]
  %v16 = vld [vmem:[%s0 + $0x28] sm:$0xff]
  %v17 = vld [vmem:[%s0 + $0x30] sm:$0xff]
  %v18 = vld [vmem:[%s0 + $0x38] sm:$0xff]
  %v19 = vld [vmem:[%s0 + $0x40] sm:$0xff]
  %v20 = vld [vmem:[%s0 + $0x48] sm:$0xff]
  %v21 = vld [vmem:[%s0 + $0x50] sm:$0xff]
  %v22 = vld [vmem:[%s0 + $0x58] sm:$0xff]
  %v23 = vld [vmem:[%s0 + $0x60] sm:$0xff]
  %v24 = vld [vmem:[%s0 + $0x68] sm:$0xff]
  %v25 = vld [vmem:[%s0 + $0x70] sm:$0xff]
  %v26 = vld [vmem:[%s0 + $0x78] sm:$0xff]
  %v27 = vld [vmem:[%s0 + $0x80] sm:$0xff]
  %v28 = vld [vmem:[%s0 + $0x88] sm:$0xff]
  %v29 = vld [vmem:[%s0 + $0x90] sm:$0xff]
  %v30 = vld [vmem:[%s0 + $0x98] sm:$0xff]
  %v31 = vld [vmem:[%s0 + $0xa0] sm:$0xff]
  %v32 = vld [vmem:[%s0 + $0xa8] sm:$0xff]
  %v33 = vld [vmem:[%s0 + $0xb0] sm:$0xff]
  %v34 = vld [vmem:[%s0 + $0xb8] sm:$0xff]
  %v35 = vld [vmem:[%s0 + $0xc0] sm:$0xff]
  %v36 = vld [vmem:[%s0 + $0xc8] sm:$0xff]
  %v37 = vld [vmem:[%s0 + $0xd0] sm:$0xff]
  %v38 = vld [vmem:[%s0 + $0xd8] sm:$0xff]
  %v39 = vld [vmem:[%s0 + $0xe0] sm:$0xff]
  %v40 = vld [vmem:[%s0 + $0xe8] sm:$0xff]
  %v41 = vld [vmem:[%s0 + $0xf0] sm:$0xff]
  %v42 = vld [vmem:[%s0 + $0xf8] sm:$0xff]
  %v43 = vld [vmem:[%s0 + $0x100] sm:$0xff]
  %v44 = vld [vmem:[%s0 + $0x108] sm:$0xff]
  %v45 = vld [vmem:[%s0 + $0x110] sm:$0xff]
  %v46 = vld [vmem:[%s0 + $0x118] sm:$0xff]
  %v47 = vld [vmem:[%s0 + $0x120] sm:$0xff]
  %v48 = vld [vmem:[%s0 + $0x128] sm:$0xff]
  %v49 = vld [vmem:[%s0 + $0x130] sm:$0xff]
  %v50 = vld [vmem:[%s0 + $0x138] sm:$0xff]
  %v51 = vld [vmem:[%s0 + $0x140] sm:$0xff]
  %v52 = vld [vmem:[%s0 + $0x148] sm:$0xff]
  %v53 = vld [vmem:[%s0 + $0x150] sm:$0xff]
  %v54 = vld [vmem:[%s0 + $0x158] sm:$0xff]
  %v55 = vld [vmem:[%s0 + $0x160] sm:$0xff]
  %v56 = vld [vmem:[%s0 + $0x168] sm:$0xff]
  %v57 = vld [vmem:[%s0 + $0x170] sm:$0xff]
  %v58 = vld [vmem:[%s0 + $0x178] sm:$0xff]
  %v59 = vld [vmem:[%s1] sm:$0xff]
  %v60 = vld [vmem:[%s1 + $0x8] sm:$0xff]
  %v61 = vld [vmem:[%s1 + $0x10] sm:$0xff]
  %v62 = vld [vmem:[%s1 + $0x18] sm:$0xff]
  %v63 = vld [vmem:[%s1 + $0x20] sm:$0xff]
  %v64 = vld [vmem:[%s1 + $0x28] sm:$0xff]
  %v65 = vld [vmem:[%s1 + $0x30] sm:$0xff]
  %v66 = vld [vmem:[%s1 + $0x38] sm:$0xff]
  %v67 = vld [vmem:[%s1 + $0x40] sm:$0xff]
  %v68 = vld [vmem:[%s1 + $0x48] sm:$0xff]
  %v69 = vld [vmem:[%s1 + $0x50] sm:$0xff]
  %v70 = vld [vmem:[%s1 + $0x58] sm:$0xff]
  %v71 = vld [vmem:[%s1 + $0x60] sm:$0xff]
  %v72 = vld [vmem:[%s1 + $0x68] sm:$0xff]
  %v73 = vld [vmem:[%s1 + $0x70] sm:$0xff]
  %v74 = vld [vmem:[%s1 + $0x78] sm:$0xff]
  %v75 = vld [vmem:[%s1 + $0x80] sm:$0xff]
  %v76 = vld [vmem:[%s1 + $0x88] sm:$0xff]
  %v77 = vld [vmem:[%s1 + $0x90] sm:$0xff]
  %v78 = vld [vmem:[%s1 + $0x98] sm:$0xff]
  %v79 = vld [vmem:[%s1 + $0xa0] sm:$0xff]
  %v80 = vld [vmem:[%s1 + $0xa8] sm:$0xff]
  %v81 = vld [vmem:[%s1 + $0xb0] sm:$0xff]
  %v82 = vld [vmem:[%s1 + $0xb8] sm:$0xff]
  %v83 = vld [vmem:[%s1 + $0xc0] sm:$0xff]
  %v84 = vld [vmem:[%s1 + $0xc8] sm:$0xff]
  %v85 = vld [vmem:[%s1 + $0xd0] sm:$0xff]
  %v86 = vld [vmem:[%s1 + $0xd8] sm:$0xff]
  %v87 = vld [vmem:[%s1 + $0xe0] sm:$0xff]
  %v88 = vld [vmem:[%s1 + $0xe8] sm:$0xff]
  %v89 = vld [vmem:[%s1 + $0xf0] sm:$0xff]
  %v90 = vld [vmem:[%s1 + $0xf8] sm:$0xff]
  %v91 = vld [vmem:[%s1 + $0x100] sm:$0xff]
  %v92 = vld [vmem:[%s1 + $0x108] sm:$0xff]
  %v93 = vld [vmem:[%s1 + $0x110] sm:$0xff]
  %v94 = vld [vmem:[%s1 + $0x118] sm:$0xff]
  %v95 = vld [vmem:[%s1 + $0x120] sm:$0xff]
  %v96 = vld [vmem:[%s1 + $0x128] sm:$0xff]
  %v97 = vld [vmem:[%s1 + $0x130] sm:$0xff]
  %v98 = vld [vmem:[%s1 + $0x138] sm:$0xff]
  %v99 = vld [vmem:[%s1 + $0x140] sm:$0xff]
  %v100 = vld [vmem:[%s1 + $0x148] sm:$0xff]
  %v101 = vld [vmem:[%s1 + $0x150] sm:$0xff]
  %v102 = vld [vmem:[%s1 + $0x158] sm:$0xff]
  %v103 = vld [vmem:[%s1 + $0x160] sm:$0xff]
  %v104 = vld [vmem:[%s1 + $0x168] sm:$0xff]
  %v105 = vld [vmem:[%s1 + $0x170] sm:$0xff]
  %v106 = vld [vmem:[%s1 + $0x178] sm:$0xff]
  %v107 = vld [vmem:[%s1 + $0x180] sm:$0xff]
  %v108 = vld [vmem:[%s1 + $0x188] sm:$0xff]
  %v109 = vld [vmem:[%s1 + $0x190] sm:$0xff]
  %v110 = vld [vmem:[%s1 + $0x198] sm:$0xff]
  %v111 = vld [vmem:[%s1 + $0x1a0] sm:$0xff]
  %v112 = vld [vmem:[%s1 + $0x1a8] sm:$0xff]
  %v113 = vld [vmem:[%s1 + $0x1b0] sm:$0xff]
  %v114 = vld [vmem:[%s1 + $0x1b8] sm:$0xff]
  %v115 = vld [vmem:[%s1 + $0x1c0] sm:$0xff]
  %v116 = vld [vmem:[%s1 + $0x1c8] sm:$0xff]
  %v117 = vld [vmem:[%s1 + $0x1d0] sm:$0xff]
  %v118 = vld [vmem:[%s1 + $0x1d8] sm:$0xff]
  %v119 = vld [vmem:[%s1 + $0x1e0] sm:$0xff]
  %v120 = vld [vmem:[%s1 + $0x1e8] sm:$0xff]
  %v121 = vld [vmem:[%s1 + $0x1f0] sm:$0xff]
  %v122 = vld [vmem:[%s1 + $0x1f8] sm:$0xff]
  %v123 = vld [vmem:[%s1 + $0x200] sm:$0xff]
  %v124 = vld [vmem:[%s1 + $0x208] sm:$0xff]
  %v125 = vld [vmem:[%s1 + $0x210] sm:$0xff]
  %v126 = vld [vmem:[%s1 + $0x218] sm:$0xff]
  %v127 = vld [vmem:[%s1 + $0x220] sm:$0xff]
  %v128 = vld [vmem:[%s1 + $0x228] sm:$0xff]
  %v129 = vld [vmem:[%s1 + $0x230] sm:$0xff]
  %v130 = vld [vmem:[%s1 + $0x238] sm:$0xff]
  %v131 = vld [vmem:[%s1 + $0x240] sm:$0xff]
  %v132 = vld [vmem:[%s1 + $0x248] sm:$0xff]
  %v133 = vld [vmem:[%s1 + $0x250] sm:$0xff]
  %v134 = vld [vmem:[%s1 + $0x258] sm:$0xff]
  %v135 = vld [vmem:[%s1 + $0x260] sm:$0xff]
  %v136 = vld [vmem:[%s1 + $0x268] sm:$0xff]
  %v137 = vld [vmem:[%s1 + $0x270] sm:$0xff]
  %v138 = vld [vmem:[%s1 + $0x278] sm:$0xff]
  %v139 = vld [vmem:[%s1 + $0x280] sm:$0xff]
  %v140 = vld [vmem:[%s1 + $0x288] sm:$0xff]
  %v141 = vld [vmem:[%s1 + $0x290] sm:$0xff]
  %v142 = vld [vmem:[%s1 + $0x298] sm:$0xff]
  %v143 = vld [vmem:[%s1 + $0x2a0] sm:$0xff]
  %v144 = vld [vmem:[%s1 + $0x2a8] sm:$0xff]
  %v145 = vld [vmem:[%s1 + $0x2b0] sm:$0xff]
  %v146 = vld [vmem:[%s1 + $0x2b8] sm:$0xff]
  %v147 = vld [vmem:[%s1 + $0x2c0] sm:$0xff]
  %v148 = vld [vmem:[%s1 + $0x2c8] sm:$0xff]
  %v149 = vld [vmem:[%s1 + $0x2d0] sm:$0xff]
  %v150 = vld [vmem:[%s1 + $0x2d8] sm:$0xff]
  %v151 = vld [vmem:[%s1 + $0x2e0] sm:$0xff]
  %v152 = vld [vmem:[%s1 + $0x2e8] sm:$0xff]
  %v153 = vld [vmem:[%s1 + $0x2f0] sm:$0xff]
  %v154 = vld [vmem:[%s1 + $0x2f8] sm:$0xff]
  %156 = vset.pattern.permute.xlu0 0
  %157 = vperm.xlu0 %156, %v11
  %v158 = vpop.permute.xlu0 %157
  %161 = vset.pattern.permute.xlu0 0
  %162 = vperm.xlu0 %161, %v12
  %v163 = vpop.permute.xlu0 %162
  %166 = vset.pattern.permute.xlu0 0
  %167 = vperm.xlu0 %166, %v13
  %v168 = vpop.permute.xlu0 %167
  %171 = vset.pattern.permute.xlu0 0
  %172 = vperm.xlu0 %171, %v14
  %v173 = vpop.permute.xlu0 %172
  %176 = vset.pattern.permute.xlu0 0
  %177 = vperm.xlu0 %176, %v15
  %v178 = vpop.permute.xlu0 %177
  %181 = vset.pattern.permute.xlu0 0
  %182 = vperm.xlu0 %181, %v16
  %v183 = vpop.permute.xlu0 %182
  %186 = vset.pattern.permute.xlu0 0
  %187 = vperm.xlu0 %186, %v17
  %v188 = vpop.permute.xlu0 %187
  %191 = vset.pattern.permute.xlu0 0
  %192 = vperm.xlu0 %191, %v18
  %v193 = vpop.permute.xlu0 %192
  %196 = vset.pattern.permute.xlu0 0
  %197 = vperm.xlu0 %196, %v19
  %v198 = vpop.permute.xlu0 %197
  %201 = vset.pattern.permute.xlu0 0
  %202 = vperm.xlu0 %201, %v20
  %v203 = vpop.permute.xlu0 %202
  %206 = vset.pattern.permute.xlu0 0
  %207 = vperm.xlu0 %206, %v21
  %v208 = vpop.permute.xlu0 %207
  %211 = vset.pattern.permute.xlu0 0
  %212 = vperm.xlu0 %211, %v22
  %v213 = vpop.permute.xlu0 %212
  %216 = vset.pattern.permute.xlu0 0
  %217 = vperm.xlu0 %216, %v23
  %v218 = vpop.permute.xlu0 %217
  %221 = vset.pattern.permute.xlu0 0
  %222 = vperm.xlu0 %221, %v24
  %v223 = vpop.permute.xlu0 %222
  %226 = vset.pattern.permute.xlu0 0
  %227 = vperm.xlu0 %226, %v25
  %v228 = vpop.permute.xlu0 %227
  %231 = vset.pattern.permute.xlu0 0
  %232 = vperm.xlu0 %231, %v26
  %v233 = vpop.permute.xlu0 %232
  %236 = vset.pattern.permute.xlu0 0
  %237 = vperm.xlu0 %236, %v27
  %v238 = vpop.permute.xlu0 %237
  %241 = vset.pattern.permute.xlu0 0
  %242 = vperm.xlu0 %241, %v28
  %v243 = vpop.permute.xlu0 %242
  %246 = vset.pattern.permute.xlu0 0
  %247 = vperm.xlu0 %246, %v29
  %v248 = vpop.permute.xlu0 %247
  %251 = vset.pattern.permute.xlu0 0
  %252 = vperm.xlu0 %251, %v30
  %v253 = vpop.permute.xlu0 %252
  %256 = vset.pattern.permute.xlu0 0
  %257 = vperm.xlu0 %256, %v31
  %v258 = vpop.permute.xlu0 %257
  %261 = vset.pattern.permute.xlu0 0
  %262 = vperm.xlu0 %261, %v32
  %v263 = vpop.permute.xlu0 %262
  %266 = vset.pattern.permute.xlu0 0
  %267 = vperm.xlu0 %266, %v33
  %v268 = vpop.permute.xlu0 %267
  %271 = vset.pattern.permute.xlu0 0
  %272 = vperm.xlu0 %271, %v34
  %v273 = vpop.permute.xlu0 %272
  %276 = vset.pattern.permute.xlu0 0
  %277 = vperm.xlu0 %276, %v35
  %v278 = vpop.permute.xlu0 %277
  %281 = vset.pattern.permute.xlu0 0
  %282 = vperm.xlu0 %281, %v36
  %v283 = vpop.permute.xlu0 %282
  %286 = vset.pattern.permute.xlu0 0
  %287 = vperm.xlu0 %286, %v37
  %v288 = vpop.permute.xlu0 %287
  %291 = vset.pattern.permute.xlu0 0
  %292 = vperm.xlu0 %291, %v38
  %v293 = vpop.permute.xlu0 %292
  %296 = vset.pattern.permute.xlu0 0
  %297 = vperm.xlu0 %296, %v39
  %v298 = vpop.permute.xlu0 %297
  %301 = vset.pattern.permute.xlu0 0
  %302 = vperm.xlu0 %301, %v40
  %v303 = vpop.permute.xlu0 %302
  %306 = vset.pattern.permute.xlu0 0
  %307 = vperm.xlu0 %306, %v41
  %v308 = vpop.permute.xlu0 %307
  %311 = vset.pattern.permute.xlu0 0
  %312 = vperm.xlu0 %311, %v42
  %v313 = vpop.permute.xlu0 %312
  %316 = vset.pattern.permute.xlu0 0
  %317 = vperm.xlu0 %316, %v43
  %v318 = vpop.permute.xlu0 %317
  %321 = vset.pattern.permute.xlu0 0
  %322 = vperm.xlu0 %321, %v44
  %v323 = vpop.permute.xlu0 %322
  %326 = vset.pattern.permute.xlu0 0
  %327 = vperm.xlu0 %326, %v45
  %v328 = vpop.permute.xlu0 %327
  %331 = vset.pattern.permute.xlu0 0
  %332 = vperm.xlu0 %331, %v46
  %v333 = vpop.permute.xlu0 %332
  %336 = vset.pattern.permute.xlu0 0
  %337 = vperm.xlu0 %336, %v47
  %v338 = vpop.permute.xlu0 %337
  %341 = vset.pattern.permute.xlu0 0
  %342 = vperm.xlu0 %341, %v48
  %v343 = vpop.permute.xlu0 %342
  %346 = vset.pattern.permute.xlu0 0
  %347 = vperm.xlu0 %346, %v49
  %v348 = vpop.permute.xlu0 %347
  %351 = vset.pattern.permute.xlu0 0
  %352 = vperm.xlu0 %351, %v50
  %v353 = vpop.permute.xlu0 %352
  %356 = vset.pattern.permute.xlu0 0
  %357 = vperm.xlu0 %356, %v51
  %v358 = vpop.permute.xlu0 %357
  %361 = vset.pattern.permute.xlu0 0
  %362 = vperm.xlu0 %361, %v52
  %v363 = vpop.permute.xlu0 %362
  %366 = vset.pattern.permute.xlu0 0
  %367 = vperm.xlu0 %366, %v53
  %v368 = vpop.permute.xlu0 %367
  %371 = vset.pattern.permute.xlu0 0
  %372 = vperm.xlu0 %371, %v54
  %v373 = vpop.permute.xlu0 %372
  %376 = vset.pattern.permute.xlu0 0
  %377 = vperm.xlu0 %376, %v55
  %v378 = vpop.permute.xlu0 %377
  %381 = vset.pattern.permute.xlu0 0
  %382 = vperm.xlu0 %381, %v56
  %v383 = vpop.permute.xlu0 %382
  %386 = vset.pattern.permute.xlu0 0
  %387 = vperm.xlu0 %386, %v57
  %v388 = vpop.permute.xlu0 %387
  %391 = vset.pattern.permute.xlu0 0
  %392 = vperm.xlu0 %391, %v58
  %v393 = vpop.permute.xlu0 %392
  %v395 = vmul.f32 %v158, %v59
  %v396 = vmul.f32 %v158, %v60
  %v397 = vmul.f32 %v163, %v61
  %v398 = vmul.f32 %v163, %v62
  %v399 = vmul.f32 %v168, %v63
  %v400 = vmul.f32 %v168, %v64
  %v401 = vmul.f32 %v173, %v65
  %v402 = vmul.f32 %v173, %v66
  %v403 = vmul.f32 %v178, %v67
  %v404 = vmul.f32 %v178, %v68
  %v405 = vmul.f32 %v183, %v69
  %v406 = vmul.f32 %v183, %v70
  %v407 = vmul.f32 %v188, %v71
  %v408 = vmul.f32 %v188, %v72
  %v409 = vmul.f32 %v193, %v73
  %v410 = vmul.f32 %v193, %v74
  %v411 = vmul.f32 %v198, %v75
  %v412 = vmul.f32 %v198, %v76
  %v413 = vmul.f32 %v203, %v77
  %v414 = vmul.f32 %v203, %v78
  %v415 = vmul.f32 %v208, %v79
  %v416 = vmul.f32 %v208, %v80
  %v417 = vmul.f32 %v213, %v81
  %v418 = vmul.f32 %v213, %v82
  %v419 = vmul.f32 %v218, %v83
  %v420 = vmul.f32 %v218, %v84
  %v421 = vmul.f32 %v223, %v85
  %v422 = vmul.f32 %v223, %v86
  %v423 = vmul.f32 %v228, %v87
  %v424 = vmul.f32 %v228, %v88
  %v425 = vmul.f32 %v233, %v89
  %v426 = vmul.f32 %v233, %v90
  %v427 = vmul.f32 %v238, %v91
  %v428 = vmul.f32 %v238, %v92
  %v429 = vmul.f32 %v243, %v93
  %v430 = vmul.f32 %v243, %v94
  %v431 = vmul.f32 %v248, %v95
  %v432 = vmul.f32 %v248, %v96
  %v433 = vmul.f32 %v253, %v97
  %v434 = vmul.f32 %v253, %v98
  %v435 = vmul.f32 %v258, %v99
  %v436 = vmul.f32 %v258, %v100
  %v437 = vmul.f32 %v263, %v101
  %v438 = vmul.f32 %v263, %v102
  %v439 = vmul.f32 %v268, %v103
  %v440 = vmul.f32 %v268, %v104
  %v441 = vmul.f32 %v273, %v105
  %v442 = vmul.f32 %v273, %v106
  %v443 = vmul.f32 %v278, %v107
  %v444 = vmul.f32 %v278, %v108
  %v445 = vmul.f32 %v283, %v109
  %v446 = vmul.f32 %v283, %v110
  %v447 = vmul.f32 %v288, %v111
  %v448 = vmul.f32 %v288, %v112
  %v449 = vmul.f32 %v293, %v113
  %v450 = vmul.f32 %v293, %v114
  %v451 = vmul.f32 %v298, %v115
  %v452 = vmul.f32 %v298, %v116
  %v453 = vmul.f32 %v303, %v117
  %v454 = vmul.f32 %v303, %v118
  %v455 = vmul.f32 %v308, %v119
  %v456 = vmul.f32 %v308, %v120
  %v457 = vmul.f32 %v313, %v121
  %v458 = vmul.f32 %v313, %v122
  %v459 = vmul.f32 %v318, %v123
  %v460 = vmul.f32 %v318, %v124
  %v461 = vmul.f32 %v323, %v125
  %v462 = vmul.f32 %v323, %v126
  %v463 = vmul.f32 %v328, %v127
  %v464 = vmul.f32 %v328, %v128
  %v465 = vmul.f32 %v333, %v129
  %v466 = vmul.f32 %v333, %v130
  %v467 = vmul.f32 %v338, %v131
  %v468 = vmul.f32 %v338, %v132
  %v469 = vmul.f32 %v343, %v133
  %v470 = vmul.f32 %v343, %v134
  %v471 = vmul.f32 %v348, %v135
  %v472 = vmul.f32 %v348, %v136
  %v473 = vmul.f32 %v353, %v137
  %v474 = vmul.f32 %v353, %v138
  %v475 = vmul.f32 %v358, %v139
  %v476 = vmul.f32 %v358, %v140
  %v477 = vmul.f32 %v363, %v141
  %v478 = vmul.f32 %v363, %v142
  %v479 = vmul.f32 %v368, %v143
  %v480 = vmul.f32 %v368, %v144
  %v481 = vmul.f32 %v373, %v145
  %v482 = vmul.f32 %v373, %v146
  %v483 = vmul.f32 %v378, %v147
  %v484 = vmul.f32 %v378, %v148
  %v485 = vmul.f32 %v383, %v149
  %v486 = vmul.f32 %v383, %v150
  %v487 = vmul.f32 %v388, %v151
  %v488 = vmul.f32 %v388, %v152
  %v489 = vmul.f32 %v393, %v153
  %v490 = vmul.f32 %v393, %v154
  %491 = vst [vmem:[%s2] sm:$0xff] %v395
  %vm492 = vcmask 556032
  %493 = vst.msk [vmem:[%s2 + $0x8] sm:$0xff] %vm492, %v396
  %494 = vst [vmem:[%s2 + $0x10] sm:$0xff] %v397
  %495 = vst.msk [vmem:[%s2 + $0x18] sm:$0xff] %vm492, %v398
  %496 = vst [vmem:[%s2 + $0x20] sm:$0xff] %v399
  %497 = vst.msk [vmem:[%s2 + $0x28] sm:$0xff] %vm492, %v400
  %498 = vst [vmem:[%s2 + $0x30] sm:$0xff] %v401
  %499 = vst.msk [vmem:[%s2 + $0x38] sm:$0xff] %vm492, %v402
  %500 = vst [vmem:[%s2 + $0x40] sm:$0xff] %v403
  %501 = vst.msk [vmem:[%s2 + $0x48] sm:$0xff] %vm492, %v404
  %502 = vst [vmem:[%s2 + $0x50] sm:$0xff] %v405
  %503 = vst.msk [vmem:[%s2 + $0x58] sm:$0xff] %vm492, %v406
  %504 = vst [vmem:[%s2 + $0x60] sm:$0xff] %v407
  %505 = vst.msk [vmem:[%s2 + $0x68] sm:$0xff] %vm492, %v408
  %506 = vst [vmem:[%s2 + $0x70] sm:$0xff] %v409
  %507 = vst.msk [vmem:[%s2 + $0x78] sm:$0xff] %vm492, %v410
  %508 = vst [vmem:[%s2 + $0x80] sm:$0xff] %v411
  %509 = vst.msk [vmem:[%s2 + $0x88] sm:$0xff] %vm492, %v412
  %510 = vst [vmem:[%s2 + $0x90] sm:$0xff] %v413
  %511 = vst.msk [vmem:[%s2 + $0x98] sm:$0xff] %vm492, %v414
  %512 = vst [vmem:[%s2 + $0xa0] sm:$0xff] %v415
  %513 = vst.msk [vmem:[%s2 + $0xa8] sm:$0xff] %vm492, %v416
  %514 = vst [vmem:[%s2 + $0xb0] sm:$0xff] %v417
  %515 = vst.msk [vmem:[%s2 + $0xb8] sm:$0xff] %vm492, %v418
  %516 = vst [vmem:[%s2 + $0xc0] sm:$0xff] %v419
  %517 = vst.msk [vmem:[%s2 + $0xc8] sm:$0xff] %vm492, %v420
  %518 = vst [vmem:[%s2 + $0xd0] sm:$0xff] %v421
  %519 = vst.msk [vmem:[%s2 + $0xd8] sm:$0xff] %vm492, %v422
  %520 = vst [vmem:[%s2 + $0xe0] sm:$0xff] %v423
  %521 = vst.msk [vmem:[%s2 + $0xe8] sm:$0xff] %vm492, %v424
  %522 = vst [vmem:[%s2 + $0xf0] sm:$0xff] %v425
  %523 = vst.msk [vmem:[%s2 + $0xf8] sm:$0xff] %vm492, %v426
  %524 = vst [vmem:[%s2 + $0x100] sm:$0xff] %v427
  %525 = vst.msk [vmem:[%s2 + $0x108] sm:$0xff] %vm492, %v428
  %526 = vst [vmem:[%s2 + $0x110] sm:$0xff] %v429
  %527 = vst.msk [vmem:[%s2 + $0x118] sm:$0xff] %vm492, %v430
  %528 = vst [vmem:[%s2 + $0x120] sm:$0xff] %v431
  %529 = vst.msk [vmem:[%s2 + $0x128] sm:$0xff] %vm492, %v432
  %530 = vst [vmem:[%s2 + $0x130] sm:$0xff] %v433
  %531 = vst.msk [vmem:[%s2 + $0x138] sm:$0xff] %vm492, %v434
  %532 = vst [vmem:[%s2 + $0x140] sm:$0xff] %v435
  %533 = vst.msk [vmem:[%s2 + $0x148] sm:$0xff] %vm492, %v436
  %534 = vst [vmem:[%s2 + $0x150] sm:$0xff] %v437
  %535 = vst.msk [vmem:[%s2 + $0x158] sm:$0xff] %vm492, %v438
  %536 = vst [vmem:[%s2 + $0x160] sm:$0xff] %v439
  %537 = vst.msk [vmem:[%s2 + $0x168] sm:$0xff] %vm492, %v440
  %538 = vst [vmem:[%s2 + $0x170] sm:$0xff] %v441
  %539 = vst.msk [vmem:[%s2 + $0x178] sm:$0xff] %vm492, %v442
  %540 = vst [vmem:[%s2 + $0x180] sm:$0xff] %v443
  %541 = vst.msk [vmem:[%s2 + $0x188] sm:$0xff] %vm492, %v444
  %542 = vst [vmem:[%s2 + $0x190] sm:$0xff] %v445
  %543 = vst.msk [vmem:[%s2 + $0x198] sm:$0xff] %vm492, %v446
  %544 = vst [vmem:[%s2 + $0x1a0] sm:$0xff] %v447
  %545 = vst.msk [vmem:[%s2 + $0x1a8] sm:$0xff] %vm492, %v448
  %546 = vst [vmem:[%s2 + $0x1b0] sm:$0xff] %v449
  %547 = vst.msk [vmem:[%s2 + $0x1b8] sm:$0xff] %vm492, %v450
  %548 = vst [vmem:[%s2 + $0x1c0] sm:$0xff] %v451
  %549 = vst.msk [vmem:[%s2 + $0x1c8] sm:$0xff] %vm492, %v452
  %550 = vst [vmem:[%s2 + $0x1d0] sm:$0xff] %v453
  %551 = vst.msk [vmem:[%s2 + $0x1d8] sm:$0xff] %vm492, %v454
  %552 = vst [vmem:[%s2 + $0x1e0] sm:$0xff] %v455
  %553 = vst.msk [vmem:[%s2 + $0x1e8] sm:$0xff] %vm492, %v456
  %554 = vst [vmem:[%s2 + $0x1f0] sm:$0xff] %v457
  %555 = vst.msk [vmem:[%s2 + $0x1f8] sm:$0xff] %vm492, %v458
  %556 = vst [vmem:[%s2 + $0x200] sm:$0xff] %v459
  %557 = vst.msk [vmem:[%s2 + $0x208] sm:$0xff] %vm492, %v460
  %558 = vst [vmem:[%s2 + $0x210] sm:$0xff] %v461
  %559 = vst.msk [vmem:[%s2 + $0x218] sm:$0xff] %vm492, %v462
  %560 = vst [vmem:[%s2 + $0x220] sm:$0xff] %v463
  %561 = vst.msk [vmem:[%s2 + $0x228] sm:$0xff] %vm492, %v464
  %562 = vst [vmem:[%s2 + $0x230] sm:$0xff] %v465
  %563 = vst.msk [vmem:[%s2 + $0x238] sm:$0xff] %vm492, %v466
  %564 = vst [vmem:[%s2 + $0x240] sm:$0xff] %v467
  %565 = vst.msk [vmem:[%s2 + $0x248] sm:$0xff] %vm492, %v468
  %566 = vst [vmem:[%s2 + $0x250] sm:$0xff] %v469
  %567 = vst.msk [vmem:[%s2 + $0x258] sm:$0xff] %vm492, %v470
  %568 = vst [vmem:[%s2 + $0x260] sm:$0xff] %v471
  %569 = vst.msk [vmem:[%s2 + $0x268] sm:$0xff] %vm492, %v472
  %570 = vst [vmem:[%s2 + $0x270] sm:$0xff] %v473
  %571 = vst.msk [vmem:[%s2 + $0x278] sm:$0xff] %vm492, %v474
  %572 = vst [vmem:[%s2 + $0x280] sm:$0xff] %v475
  %573 = vst.msk [vmem:[%s2 + $0x288] sm:$0xff] %vm492, %v476
  %574 = vst [vmem:[%s2 + $0x290] sm:$0xff] %v477
  %575 = vst.msk [vmem:[%s2 + $0x298] sm:$0xff] %vm492, %v478
  %576 = vst [vmem:[%s2 + $0x2a0] sm:$0xff] %v479
  %577 = vst.msk [vmem:[%s2 + $0x2a8] sm:$0xff] %vm492, %v480
  %578 = vst [vmem:[%s2 + $0x2b0] sm:$0xff] %v481
  %579 = vst.msk [vmem:[%s2 + $0x2b8] sm:$0xff] %vm492, %v482
  %580 = vst [vmem:[%s2 + $0x2c0] sm:$0xff] %v483
  %581 = vst.msk [vmem:[%s2 + $0x2c8] sm:$0xff] %vm492, %v484
  %582 = vst [vmem:[%s2 + $0x2d0] sm:$0xff] %v485
  %583 = vst.msk [vmem:[%s2 + $0x2d8] sm:$0xff] %vm492, %v486
  %584 = vst [vmem:[%s2 + $0x2e0] sm:$0xff] %v487
  %585 = vst.msk [vmem:[%s2 + $0x2e8] sm:$0xff] %vm492, %v488
  %586 = vst [vmem:[%s2 + $0x2f0] sm:$0xff] %v489
  %587 = vst.msk [vmem:[%s2 + $0x2f8] sm:$0xff] %vm492, %v490
  // Predicated region
  $region10: #{layer_scale_mul.1} parent=0 // pred_check
    _
  $region11: #{layer_scale_mul.1} parent=0 // pred_check_branch
    %589 = sbr.rel (0) target = $region13
  $region12: #{layer_scale_mul.1} parent=0 // pred_region
    _
  $region13: #{layer_scale_mul.1} parent=0 // pred_fallthru
    _
  // Predicated region
  $region14: #{layer_scale_mul.1} parent=0 // pred_check
    _
  $region15: #{layer_scale_mul.1} parent=0 // pred_check_branch
    %591 = sbr.rel (0) target = $region17
  $region16: #{layer_scale_mul.1} parent=0 // pred_region
    _
  $region17: #{layer_scale_mul.1} parent=0 // pred_fallthru
    _

</llo_original>
